<compile_context>
chip_gen: v5e
topology: v5e:2x2
jax: 0.10.0
libtpu: 0.0.40
codegen_flags: <defaults>
</compile_context>

<pallas_src>
import jax
import jax.numpy as jnp
from jax.experimental import pallas as pl
from jax.experimental.pallas import tpu as pltpu

# torch_geometric.utils.smiles.e_map cardinalities: bond_type, stereo, is_conjugated
EDGE_FEAT_DIMS = [22, 6, 2]


def _round_up(x, m):
    return ((x + m - 1) // m) * m


def _make_kernel(offsets, num_feats, pack, r_band):
    offsets = tuple(int(o) for o in offsets)

    def kernel(xp_ref, table_ref, o_ref):
        xv = xp_ref[...]                                   # (tmp, pack*F) int32
        k_dim = pack * r_band                              # 128 for E=32
        # One global (1, K) iota; broadcasts against (tmp, 1) indices.
        col = jax.lax.broadcasted_iota(jnp.int32, (1, k_dim), 1)
        hot = None
        for b in range(pack):                              # static, pack*F is tiny
            for f in range(num_feats):
                c = b * num_feats + f
                # slot b's feature f lives in rows [b*r_band+off_f, ...): all
                # pack*F targets are disjoint, so OR of the compares == sum.
                idx = xv[:, c:c + 1] + (b * r_band + offsets[f])   # (tmp, 1)
                m = col == idx                                      # (tmp, K) bool
                hot = m if hot is None else (hot | m)
        multi_hot = hot.astype(table_ref.dtype)            # single convert
        # sum_f table[x[:,f]+off_f] == multi_hot @ block_diag(table)   (MXU)
        o_ref[...] = jnp.dot(multi_hot, table_ref[...],
                             preferred_element_type=jnp.float32).astype(o_ref.dtype)

    return kernel


def build_tables(key, emb_dim):
    """Deterministic xavier_uniform init per bond-feature embedding table."""
    tables = []
    for i, dim in enumerate(EDGE_FEAT_DIMS):
        k = jax.random.fold_in(key, i)
        bound = (6.0 / (dim + emb_dim)) ** 0.5              # xavier_uniform (dim, emb_dim)
        tables.append(jax.random.uniform(k, (dim, emb_dim), jnp.float32,
                                         minval=-bound, maxval=bound))
    return tables


def build_encoder_params(tables, emb_dim):
    """One-time (per model) packing of the tables into the block-diagonal form."""
    E = emb_dim
    pack = 128 // E if (E <= 128 and 128 % E == 0) else 1
    r_use = sum(EDGE_FEAT_DIMS)                             # 30 useful rows
    r_band = _round_up(max(r_use, 8), 8)                    # 32 rows per slot band
    table = jnp.concatenate(tables, axis=0)                 # (30, E)
    table = jnp.pad(table, ((0, r_band - r_use), (0, 0)))   # (32, E)
    # Slot b reads K band b and writes lane band b.  (128, 128) f32 = 64 KB.
    table_bd = jnp.kron(jnp.eye(pack, dtype=table.dtype), table)
    offsets = [0]
    for d in EDGE_FEAT_DIMS[:-1]:
        offsets.append(offsets[-1] + d)
    return table_bd, tuple(offsets), pack, r_band


def bond_encoder_pallas(edge_attr, table_bd, offsets, pack, r_band, *,
                        tm=16384, out_dtype=jnp.float32):
    """edge_attr: (N, F) int32; table_bd: (pack*r_band, pack*E) block-diagonal table."""
    N, F = edge_attr.shape
    K, L = table_bd.shape
    assert K == pack * r_band and F == len(EDGE_FEAT_DIMS)
    E = L // pack

    # Packed-row tiling: multiple of 8 sublanes; large tiles to amortize the
    # per-grid-step overhead, but split into >= 2 blocks when there is enough
    # work so both v7x TensorCores are used.
    np_rows = pl.cdiv(N, pack)
    np_rows_pad8 = _round_up(max(np_rows, 1), 8)
    tmp = max(tm // pack, 8)
    tmp = min(tmp, np_rows_pad8)
    if np_rows_pad8 > 8 and tmp >= np_rows_pad8:
        tmp = _round_up(pl.cdiv(np_rows_pad8, 2), 8)
    tmp = _round_up(tmp, 8)
    n_blocks = pl.cdiv(np_rows, tmp)
    Np = tmp * n_blocks
    N_pad = Np * pack

    # Pad with index 0 (valid row for every feature); padded rows sliced off below.
    # TODO(synk): nn.Embedding raises on out-of-range indices; this kernel silently
    # maps them into another band / the zero-padded rows instead of raising.
    x_pad = jnp.pad(edge_attr.astype(jnp.int32), ((0, N_pad - N), (0, 0)))
    x_packed = x_pad.reshape(Np, pack * F)                  # [g, b*F+f] == x_pad[g*pack+b, f]

    kernel = _make_kernel(offsets, F, pack, r_band)

    # Useful work only (not the zero-padded block-diag MACs); table fetched once.
    r_use = sum(EDGE_FEAT_DIMS)
    flops = int(2 * N * r_use * E)
    bytes_accessed = int(N * F * 4
                         + N * E * jnp.dtype(out_dtype).itemsize
                         + table_bd.size * table_bd.dtype.itemsize)

    out = pl.pallas_call(
        kernel,
        out_shape=jax.ShapeDtypeStruct((Np, L), out_dtype),
        grid=(n_blocks,),
        in_specs=[
            pl.BlockSpec((tmp, pack * F), lambda i: (i, 0)),   # packed edge features
            pl.BlockSpec((K, L), lambda i: (0, 0)),            # 64 KB table, VMEM-resident
        ],
        out_specs=pl.BlockSpec((tmp, L), lambda i: (i, 0)),    # lane-dense (…, 128) stores
        compiler_params=pltpu.CompilerParams(dimension_semantics=("parallel",)),
        cost_estimate=pl.CostEstimate(flops=flops, transcendentals=0,
                                      bytes_accessed=bytes_accessed),
    )(x_packed, table_bd)

    # Free row-major view back to one edge per row, drop padded edges.
    return out.reshape(N_pad, E)[:N]


def bond_encoder_ref(edge_attr, tables):
    out = 0
    for f, t in enumerate(tables):
        out = out + t[edge_attr[:, f]]
    return out


if __name__ == "__main__":
    emb_dim = 32
    N = 16
    F = len(EDGE_FEAT_DIMS)

    key = jax.random.PRNGKey(0)
    tables = build_tables(key, emb_dim)
    table_bd, offsets, pack, r_band = build_encoder_params(tables, emb_dim)

    # Deterministic integer bond features, each column within its cardinality.
    kx = jax.random.fold_in(key, 1000)
    cols = []
    for f, dim in enumerate(EDGE_FEAT_DIMS):
        cols.append(jax.random.randint(jax.random.fold_in(kx, f), (N, 1), 0, dim,
                                       dtype=jnp.int32))
    edge_attr = jnp.concatenate(cols, axis=1)               # (N, F) int32

    out = bond_encoder_pallas(edge_attr, table_bd, offsets, pack, r_band)
    out = jax.block_until_ready(out)

    ref = bond_encoder_ref(edge_attr, tables)
    assert out.shape == (N, emb_dim)
    assert jnp.allclose(out, ref, atol=1e-5, rtol=1e-5)

    print("KERNEL_OK")
</pallas_src>

<mosaic_0001>
module attributes {stable_mosaic.version = 11 : i64} {
  func.func @kernel(%arg0: i32, %arg1: memref<8x12xi32, #tpu.memory_space<vmem>>, %arg2: memref<128x128xf32, #tpu.memory_space<vmem>>, %arg3: memref<8x128xf32, #tpu.memory_space<vmem>>) attributes {dimension_semantics = [#tpu.dimension_semantics<parallel>], iteration_bounds = array<i64: 1>, scalar_prefetch = 0 : i64, scratch_operands = 0 : i64, tpu.core_type = #tpu.core_type<tc>, window_params = [{transform_indices = @transform_0, window_bounds = array<i64: 8, 12>}, {pipeline_mode = #tpu.pipeline_mode<synchronous>, transform_indices = @transform_1, window_bounds = array<i64: 128, 128>}, {transform_indices = @transform_2, window_bounds = array<i64: 8, 128>}]} {
    %c0 = arith.constant 0 : index
    %c0_0 = arith.constant 0 : index
    %0 = vector.load %arg1[%c0, %c0_0] : memref<8x12xi32, #tpu.memory_space<vmem>>, vector<8x12xi32>
    %1 = tpu.iota {dimensions = array<i32: 1>} : vector<1x128xi32>
    %2 = vector.extract_strided_slice %0 {offsets = [0, 0], sizes = [8, 1], strides = [1, 1]} : vector<8x12xi32> to vector<8x1xi32>
    %c0_i32 = arith.constant 0 : i32
    %3 = vector.broadcast %c0_i32 : i32 to vector<8x1xi32>
    %4 = arith.addi %2, %3 : vector<8x1xi32>
    %5 = vector.broadcast %1 : vector<1x128xi32> to vector<8x128xi32>
    %6 = vector.broadcast %4 : vector<8x1xi32> to vector<8x128xi32>
    %7 = arith.cmpi eq, %5, %6 : vector<8x128xi32>
    %8 = vector.extract_strided_slice %0 {offsets = [0, 1], sizes = [8, 1], strides = [1, 1]} : vector<8x12xi32> to vector<8x1xi32>
    %c22_i32 = arith.constant 22 : i32
    %9 = vector.broadcast %c22_i32 : i32 to vector<8x1xi32>
    %10 = arith.addi %8, %9 : vector<8x1xi32>
    %11 = vector.broadcast %1 : vector<1x128xi32> to vector<8x128xi32>
    %12 = vector.broadcast %10 : vector<8x1xi32> to vector<8x128xi32>
    %13 = arith.cmpi eq, %11, %12 : vector<8x128xi32>
    %14 = arith.ori %7, %13 : vector<8x128xi1>
    %15 = vector.extract_strided_slice %0 {offsets = [0, 2], sizes = [8, 1], strides = [1, 1]} : vector<8x12xi32> to vector<8x1xi32>
    %c28_i32 = arith.constant 28 : i32
    %16 = vector.broadcast %c28_i32 : i32 to vector<8x1xi32>
    %17 = arith.addi %15, %16 : vector<8x1xi32>
    %18 = vector.broadcast %1 : vector<1x128xi32> to vector<8x128xi32>
    %19 = vector.broadcast %17 : vector<8x1xi32> to vector<8x128xi32>
    %20 = arith.cmpi eq, %18, %19 : vector<8x128xi32>
    %21 = arith.ori %14, %20 : vector<8x128xi1>
    %22 = vector.extract_strided_slice %0 {offsets = [0, 3], sizes = [8, 1], strides = [1, 1]} : vector<8x12xi32> to vector<8x1xi32>
    %c32_i32 = arith.constant 32 : i32
    %23 = vector.broadcast %c32_i32 : i32 to vector<8x1xi32>
    %24 = arith.addi %22, %23 : vector<8x1xi32>
    %25 = vector.broadcast %1 : vector<1x128xi32> to vector<8x128xi32>
    %26 = vector.broadcast %24 : vector<8x1xi32> to vector<8x128xi32>
    %27 = arith.cmpi eq, %25, %26 : vector<8x128xi32>
    %28 = arith.ori %21, %27 : vector<8x128xi1>
    %29 = vector.extract_strided_slice %0 {offsets = [0, 4], sizes = [8, 1], strides = [1, 1]} : vector<8x12xi32> to vector<8x1xi32>
    %c54_i32 = arith.constant 54 : i32
    %30 = vector.broadcast %c54_i32 : i32 to vector<8x1xi32>
    %31 = arith.addi %29, %30 : vector<8x1xi32>
    %32 = vector.broadcast %1 : vector<1x128xi32> to vector<8x128xi32>
    %33 = vector.broadcast %31 : vector<8x1xi32> to vector<8x128xi32>
    %34 = arith.cmpi eq, %32, %33 : vector<8x128xi32>
    %35 = arith.ori %28, %34 : vector<8x128xi1>
    %36 = vector.extract_strided_slice %0 {offsets = [0, 5], sizes = [8, 1], strides = [1, 1]} : vector<8x12xi32> to vector<8x1xi32>
    %c60_i32 = arith.constant 60 : i32
    %37 = vector.broadcast %c60_i32 : i32 to vector<8x1xi32>
    %38 = arith.addi %36, %37 : vector<8x1xi32>
    %39 = vector.broadcast %1 : vector<1x128xi32> to vector<8x128xi32>
    %40 = vector.broadcast %38 : vector<8x1xi32> to vector<8x128xi32>
    %41 = arith.cmpi eq, %39, %40 : vector<8x128xi32>
    %42 = arith.ori %35, %41 : vector<8x128xi1>
    %43 = vector.extract_strided_slice %0 {offsets = [0, 6], sizes = [8, 1], strides = [1, 1]} : vector<8x12xi32> to vector<8x1xi32>
    %c64_i32 = arith.constant 64 : i32
    %44 = vector.broadcast %c64_i32 : i32 to vector<8x1xi32>
    %45 = arith.addi %43, %44 : vector<8x1xi32>
    %46 = vector.broadcast %1 : vector<1x128xi32> to vector<8x128xi32>
    %47 = vector.broadcast %45 : vector<8x1xi32> to vector<8x128xi32>
    %48 = arith.cmpi eq, %46, %47 : vector<8x128xi32>
    %49 = arith.ori %42, %48 : vector<8x128xi1>
    %50 = vector.extract_strided_slice %0 {offsets = [0, 7], sizes = [8, 1], strides = [1, 1]} : vector<8x12xi32> to vector<8x1xi32>
    %c86_i32 = arith.constant 86 : i32
    %51 = vector.broadcast %c86_i32 : i32 to vector<8x1xi32>
    %52 = arith.addi %50, %51 : vector<8x1xi32>
    %53 = vector.broadcast %1 : vector<1x128xi32> to vector<8x128xi32>
    %54 = vector.broadcast %52 : vector<8x1xi32> to vector<8x128xi32>
    %55 = arith.cmpi eq, %53, %54 : vector<8x128xi32>
    %56 = arith.ori %49, %55 : vector<8x128xi1>
    %57 = vector.extract_strided_slice %0 {offsets = [0, 8], sizes = [8, 1], strides = [1, 1]} : vector<8x12xi32> to vector<8x1xi32>
    %c92_i32 = arith.constant 92 : i32
    %58 = vector.broadcast %c92_i32 : i32 to vector<8x1xi32>
    %59 = arith.addi %57, %58 : vector<8x1xi32>
    %60 = vector.broadcast %1 : vector<1x128xi32> to vector<8x128xi32>
    %61 = vector.broadcast %59 : vector<8x1xi32> to vector<8x128xi32>
    %62 = arith.cmpi eq, %60, %61 : vector<8x128xi32>
    %63 = arith.ori %56, %62 : vector<8x128xi1>
    %64 = vector.extract_strided_slice %0 {offsets = [0, 9], sizes = [8, 1], strides = [1, 1]} : vector<8x12xi32> to vector<8x1xi32>
    %c96_i32 = arith.constant 96 : i32
    %65 = vector.broadcast %c96_i32 : i32 to vector<8x1xi32>
    %66 = arith.addi %64, %65 : vector<8x1xi32>
    %67 = vector.broadcast %1 : vector<1x128xi32> to vector<8x128xi32>
    %68 = vector.broadcast %66 : vector<8x1xi32> to vector<8x128xi32>
    %69 = arith.cmpi eq, %67, %68 : vector<8x128xi32>
    %70 = arith.ori %63, %69 : vector<8x128xi1>
    %71 = vector.extract_strided_slice %0 {offsets = [0, 10], sizes = [8, 1], strides = [1, 1]} : vector<8x12xi32> to vector<8x1xi32>
    %c118_i32 = arith.constant 118 : i32
    %72 = vector.broadcast %c118_i32 : i32 to vector<8x1xi32>
    %73 = arith.addi %71, %72 : vector<8x1xi32>
    %74 = vector.broadcast %1 : vector<1x128xi32> to vector<8x128xi32>
    %75 = vector.broadcast %73 : vector<8x1xi32> to vector<8x128xi32>
    %76 = arith.cmpi eq, %74, %75 : vector<8x128xi32>
    %77 = arith.ori %70, %76 : vector<8x128xi1>
    %78 = vector.extract_strided_slice %0 {offsets = [0, 11], sizes = [8, 1], strides = [1, 1]} : vector<8x12xi32> to vector<8x1xi32>
    %c124_i32 = arith.constant 124 : i32
    %79 = vector.broadcast %c124_i32 : i32 to vector<8x1xi32>
    %80 = arith.addi %78, %79 : vector<8x1xi32>
    %81 = vector.broadcast %1 : vector<1x128xi32> to vector<8x128xi32>
    %82 = vector.broadcast %80 : vector<8x1xi32> to vector<8x128xi32>
    %83 = arith.cmpi eq, %81, %82 : vector<8x128xi32>
    %84 = arith.ori %77, %83 : vector<8x128xi1>
    %85 = arith.extui %84 : vector<8x128xi1> to vector<8x128xi32>
    %86 = arith.sitofp %85 : vector<8x128xi32> to vector<8x128xf32>
    %c0_1 = arith.constant 0 : index
    %c0_2 = arith.constant 0 : index
    %87 = vector.load %arg2[%c0_1, %c0_2] : memref<128x128xf32, #tpu.memory_space<vmem>>, vector<128x128xf32>
    %cst = arith.constant dense<0.000000e+00> : vector<8x128xf32>
    %88 = tpu.matmul %86, %87, %cst {dimension_numbers = #tpu.dot_dimension_numbers<[1], [0], [0], [1], [0, 0, 1, 1], [], []>} : vector<8x128xf32>, vector<128x128xf32>, vector<8x128xf32> -> vector<8x128xf32>
    %c0_3 = arith.constant 0 : index
    %c0_4 = arith.constant 0 : index
    %89 = vector.load %arg3[%c0_3, %c0_4] : memref<8x128xf32, #tpu.memory_space<vmem>>, vector<8x128xf32>
    tpu.vector_store %arg3[%c0_3, %c0_4], %88 {strides = array<i32>} : memref<8x128xf32, #tpu.memory_space<vmem>>, vector<8x128xf32>,
    return
  }
  func.func @transform_0(%arg0: i32) -> (i32, i32) {
    %c0_i32 = arith.constant 0 : i32
    %c0_i32_0 = arith.constant 0 : i32
    return %arg0, %c0_i32 : i32, i32
  }
  func.func @transform_1(%arg0: i32) -> (i32, i32) {
    %c0_i32 = arith.constant 0 : i32
    %c0_i32_0 = arith.constant 0 : i32
    %c0_i32_1 = arith.constant 0 : i32
    return %c0_i32, %c0_i32_0 : i32, i32
  }
  func.func @transform_2(%arg0: i32) -> (i32, i32) {
    %c0_i32 = arith.constant 0 : i32
    %c0_i32_0 = arith.constant 0 : i32
    return %arg0, %c0_i32 : i32, i32
  }
}

</mosaic_0001>

<llo_original>
// kernel: tpu_custom_call.1
$region0: #{tpu_custom_call.1}
  #allocation0 [shape = 'u32[]', space=smem, size = 0x4, offset = 0x4, fixed_abs, tag = 'smem constant byte address 0x4 - core index']
  #allocation1 [shape = 'u32[72,128]{1,0:T(1,128)}', space=vmem, size = 0x9000, scoped, tag = 'internal scratch']
  %s0 = inlined_call_operand.hbm [shape: s32[8,12], index: 0, kind: input, shape index: {}]
  %s1 = inlined_call_operand.hbm [shape: f32[128,128], index: 1, kind: input, shape index: {}]
  %s2 = inlined_call_operand.hbm [shape: f32[8,128], index: 2, kind: output, shape index: {}]
  %s3 = sld [smem:[#allocation0]]
  $region26: #{tpu_custom_call.1} parent=0
    _
  %s5 = ssub.s32 1, %s3
  %s6 = scalar_select 0, %s5, %s3
  $region1: #{tpu_custom_call.1} parent=0
    #allocation2 [shape = 'u8[4096]{0}', space=vmem, size = 0x1000, scoped, tag = 'input window, operand 0, single buffered']
    #allocation3 [shape = 's32[1]{0}', space=sflag, size = 0x4, scoped, tag = 'scoped memory for tpu_custom_call.1']
    #allocation4 [shape = 's32[1]{0}', space=sflag, size = 0x4, scoped, tag = 'scoped memory for tpu_custom_call.1']
    #allocation5 [shape = 'u8[65536]{0}', space=vmem, size = 0x10000, scoped, tag = 'input window, operand 1, single buffered']
    #allocation6 [shape = 's32[1]{0}', space=sflag, size = 0x4, scoped, tag = 'scoped memory for tpu_custom_call.1']
    #allocation7 [shape = 'u8[4096]{0}', space=vmem, size = 0x1000, scoped, tag = 'output window, operand 0, single buffered']
    %7 = vsyncpa [#allocation3], 0
    %8 = vsyncpa [#allocation6], 0
    %9 = vsyncpa [#allocation4], 0
    // Predicated region
    $region2: #{tpu_custom_call.1} parent=1 // pred_check
      _
    $region3: #{tpu_custom_call.1} parent=1 // pred_check_branch
      %11 = sbr.rel (0) target = $region5
    $region4: #{tpu_custom_call.1} parent=1 // pred_region
      %13 = vsyncadd [#allocation3], 0
      %s15 = sshll.u32 %s0, 4
      %s16 = int_to_ptr.hbm [resolvable:$true] %s15
      %s17 = sshll.u32 [#allocation2], 4
      %s18 = int_to_ptr.vmem [resolvable:$true] %s17
      %20 = dma.hbm_to_vmem [thread:$0]  %s16, 128, %s18, [#allocation3]
    $region5: #{tpu_custom_call.1} parent=1 // pred_fallthru
      _
    // Predicated region
    $region6: #{tpu_custom_call.1} parent=1 // pred_check
      _
    $region7: #{tpu_custom_call.1} parent=1 // pred_check_branch
      %22 = sbr.rel (0) target = $region9
    $region8: #{tpu_custom_call.1} parent=1 // pred_region
      %24 = vsyncadd [#allocation6], 0
      %s25 = sshll.u32 %s1, 4
      %s26 = int_to_ptr.hbm [resolvable:$true] %s25
      %s27 = sshll.u32 [#allocation5], 4
      %s28 = int_to_ptr.vmem [resolvable:$true] %s27
      %33 = dma.hbm_to_vmem [thread:$0]  %s26, 2048, %s28, [#allocation6], 128, 128, 8
    $region9: #{tpu_custom_call.1} parent=1 // pred_fallthru
      _
    // Predicated region
    $region10: #{tpu_custom_call.1} parent=1 // pred_check
      _
    $region11: #{tpu_custom_call.1} parent=1 // pred_check_branch
      %35 = sbr.rel (0) target = $region13
    $region12: #{tpu_custom_call.1} parent=1 // pred_region
      %37 = dma.done [#allocation3], 128
    $region13: #{tpu_custom_call.1} parent=1 // pred_fallthru
      _
    // Predicated region
    $region14: #{tpu_custom_call.1} parent=1 // pred_check
      _
    $region15: #{tpu_custom_call.1} parent=1 // pred_check_branch
      %39 = sbr.rel (0) target = $region17
    $region16: #{tpu_custom_call.1} parent=1 // pred_region
      %41 = dma.done [#allocation6], 2048
    $region17: #{tpu_custom_call.1} parent=1 // pred_fallthru
      _
    %v42 = vld [vmem:[#allocation2] sm:$0xff]
    %v43 = vlaneseq
    %v44 = vand.u32 %v43, 127
    %45 = vset.pattern.permute.xlu0 0
    %46 = vperm.xlu0 %45, %v42
    %v47 = vpop.permute.xlu0 %46
    %vm48 = vcmp.eq.s32.totalorder %v44, %v47
    %v49 = vadd.s32 %v42, 22
    %50 = vset.pattern.permute.xlu0 1
    %51 = vperm.xlu0 %50, %v49
    %v52 = vpop.permute.xlu0 %51
    %vm53 = vcmp.eq.s32.totalorder %v44, %v52
    %vm54 = vmor %vm48, %vm53
    %v55 = vadd.s32 %v42, 28
    %56 = vset.pattern.permute.xlu0 2
    %57 = vperm.xlu0 %56, %v55
    %v58 = vpop.permute.xlu0 %57
    %vm59 = vcmp.eq.s32.totalorder %v44, %v58
    %vm60 = vmor %vm54, %vm59
    %v61 = vadd.s32 %v42, 32
    %62 = vset.pattern.permute.xlu0 3
    %63 = vperm.xlu0 %62, %v61
    %v64 = vpop.permute.xlu0 %63
    %vm65 = vcmp.eq.s32.totalorder %v44, %v64
    %vm66 = vmor %vm60, %vm65
    %v67 = vadd.s32 %v42, 54
    %68 = vset.pattern.permute.xlu0 4
    %69 = vperm.xlu0 %68, %v67
    %v70 = vpop.permute.xlu0 %69
    %vm71 = vcmp.eq.s32.totalorder %v44, %v70
    %vm72 = vmor %vm66, %vm71
    %v73 = vadd.s32 %v42, 60
    %74 = vset.pattern.permute.xlu0 5
    %75 = vperm.xlu0 %74, %v73
    %v76 = vpop.permute.xlu0 %75
    %vm77 = vcmp.eq.s32.totalorder %v44, %v76
    %vm78 = vmor %vm72, %vm77
    %v79 = vadd.s32 %v42, 64
    %80 = vset.pattern.permute.xlu0 6
    %81 = vperm.xlu0 %80, %v79
    %v82 = vpop.permute.xlu0 %81
    %vm83 = vcmp.eq.s32.totalorder %v44, %v82
    %vm84 = vmor %vm78, %vm83
    %v85 = vadd.s32 %v42, 86
    %86 = vset.pattern.permute.xlu0 7
    %87 = vperm.xlu0 %86, %v85
    %v88 = vpop.permute.xlu0 %87
    %vm89 = vcmp.eq.s32.totalorder %v44, %v88
    %vm90 = vmor %vm84, %vm89
    %v91 = vadd.s32 %v42, 92
    %92 = vset.pattern.permute.xlu0 8
    %93 = vperm.xlu0 %92, %v91
    %v94 = vpop.permute.xlu0 %93
    %vm95 = vcmp.eq.s32.totalorder %v44, %v94
    %vm96 = vmor %vm90, %vm95
    %v97 = vadd.s32 %v42, 96
    %98 = vset.pattern.permute.xlu0 9
    %99 = vperm.xlu0 %98, %v97
    %v100 = vpop.permute.xlu0 %99
    %vm101 = vcmp.eq.s32.totalorder %v44, %v100
    %vm102 = vmor %vm96, %vm101
    %v103 = vadd.s32 %v42, 118
    %104 = vset.pattern.permute.xlu0 10
    %105 = vperm.xlu0 %104, %v103
    %v106 = vpop.permute.xlu0 %105
    %vm107 = vcmp.eq.s32.totalorder %v44, %v106
    %vm108 = vmor %vm102, %vm107
    %v109 = vadd.s32 %v42, 124
    %110 = vset.pattern.permute.xlu0 11
    %111 = vperm.xlu0 %110, %v109
    %v112 = vpop.permute.xlu0 %111
    %vm113 = vcmp.eq.s32.totalorder %v44, %v112
    %vm114 = vmor %vm108, %vm113
    %v115 = vsel %vm114, 1, 0
    %v116 = vcvt.s32.f32 %v115
    %v117 = vld [vmem:[#allocation5] sm:$0xff]
    %v118 = vld [vmem:[#allocation5 + $0x8] sm:$0xff]
    %v119 = vld [vmem:[#allocation5 + $0x10] sm:$0xff]
    %v120 = vld [vmem:[#allocation5 + $0x18] sm:$0xff]
    %v121 = vld [vmem:[#allocation5 + $0x20] sm:$0xff]
    %v122 = vld [vmem:[#allocation5 + $0x28] sm:$0xff]
    %v123 = vld [vmem:[#allocation5 + $0x30] sm:$0xff]
    %v124 = vld [vmem:[#allocation5 + $0x38] sm:$0xff]
    %v125 = vld [vmem:[#allocation5 + $0x40] sm:$0xff]
    %v126 = vld [vmem:[#allocation5 + $0x48] sm:$0xff]
    %v127 = vld [vmem:[#allocation5 + $0x50] sm:$0xff]
    %v128 = vld [vmem:[#allocation5 + $0x58] sm:$0xff]
    %v129 = vld [vmem:[#allocation5 + $0x60] sm:$0xff]
    %v130 = vld [vmem:[#allocation5 + $0x68] sm:$0xff]
    %v131 = vld [vmem:[#allocation5 + $0x70] sm:$0xff]
    %v132 = vld [vmem:[#allocation5 + $0x78] sm:$0xff]
    %133 = vmatpush.msra.mxu0 %v132
    %134 = vmatpush.msra.mxu0 %v131
    %135 = vmatpush.msra.mxu0 %v130
    %136 = vmatpush.msra.mxu0 %v129
    %137 = vmatpush.msra.mxu0 %v128
    %138 = vmatpush.msra.mxu0 %v127
    %139 = vmatpush.msra.mxu0 %v126
    %140 = vmatpush.msra.mxu0 %v125
    %141 = vmatpush.msra.mxu0 %v124
    %142 = vmatpush.msra.mxu0 %v123
    %143 = vmatpush.msra.mxu0 %v122
    %144 = vmatpush.msra.mxu0 %v121
    %145 = vmatpush.msra.mxu0 %v120
    %146 = vmatpush.msra.mxu0 %v119
    %147 = vmatpush.msra.mxu0 %v118
    %148 = vmatpush.msra.mxu0 %v117
    %149 = vmatmul.f32.gmra.mxu0 %v116
    %v150 = vpop.f32.mrf.mxu0
    %v151 = vadd.f32 0.0, %v150
    %152 = vdwg.mxu0
    %153 = vst [vmem:[#allocation7] sm:$0xff] %v151
    // Predicated region
    $region18: #{tpu_custom_call.1} parent=1 // pred_check
      _
    $region19: #{tpu_custom_call.1} parent=1 // pred_check_branch
      %155 = sbr.rel (0) target = $region21
    $region20: #{tpu_custom_call.1} parent=1 // pred_region
      %157 = vsyncadd [#allocation4], 0
      %s159 = sshll.u32 [#allocation7], 4
      %s160 = int_to_ptr.vmem [resolvable:$true] %s159
      %s161 = sshll.u32 %s2, 4
      %s162 = int_to_ptr.hbm [resolvable:$true] %s161
      %164 = dma.vmem_to_hbm [thread:$0]  %s160, 128, %s162, [#allocation4]
    $region21: #{tpu_custom_call.1} parent=1 // pred_fallthru
      _
    // Predicated region
    $region22: #{tpu_custom_call.1} parent=1 // pred_check
      _
    $region23: #{tpu_custom_call.1} parent=1 // pred_check_branch
      %166 = sbr.rel (0) target = $region25
    $region24: #{tpu_custom_call.1} parent=1 // pred_region
      %168 = dma.done [#allocation4], 128
    $region25: #{tpu_custom_call.1} parent=1 // pred_fallthru
      _
    %169 = vsyncpa [#allocation3], 1
    %170 = vsyncpa [#allocation6], 1
    %171 = vsyncpa [#allocation4], 1

</llo_original>
